<compile_context>
chip_gen: v6e
topology: v6e:2x2x1
jax: 0.10.0
libtpu: 0.0.40
codegen_flags: <defaults>
</compile_context>

<pallas_src>
import jax
import jax.numpy as jnp
from jax.experimental import pallas as pl
from jax.experimental.pallas import tpu as pltpu

KERNEL_SIZE = 3  # Conv1d kernel size of the module


def conv_layer_kernel(x_ref, w_ref, b_ref, o_ref):
    tb, lh, c2 = x_ref.shape                 # (block_b, L//2, 2C) packed tile
    c = c2 // 2
    m = tb * lh                              # matmul M dimension (flattened rows)
    cdt = w_ref.dtype                        # matmul input dtype (bf16 by default)

    # ---- load packed tile & build the circular "previous pair" stream --------
    # Packed row (b, t) holds [x[b, 2t] | x[b, 2t+1]] on the lane axis.
    xt = x_ref[...].reshape(m, c2)                        # (M, 2C), input dtype
    r1 = pltpu.roll(xt, shift=1, axis=0)                  # flat row m-1 (circular)
    if tb > 1:
        # Fix the per-batch wrap: the first row of each batch element must see
        # that SAME batch element's last row, not the previous batch's.
        seq2 = jax.lax.broadcasted_iota(jnp.int32, (tb, lh, c2), 1).reshape(m, c2)
        r2 = pltpu.roll(xt, shift=(1 - lh) % m, axis=0)   # flat row m+lh-1 (circular)
        prev = jnp.where(seq2 == 0, r2, r1)
        seq_c = seq2[:, :c]                               # reuse for the pool mask
    else:
        prev = r1                                         # single batch: wrap already correct
        seq_c = jax.lax.broadcasted_iota(jnp.int32, (tb, lh, c), 1).reshape(m, c)

    # Cast once after load/roll (rolls run on the input dtype; MXU gets bf16).
    xt_c = xt.astype(cdt)
    prev_c = prev.astype(cdt)                             # [x[2t-2] | x[2t-1]]
    xe = xt_c[:, :c]                                      # x[2t]
    xo_p = prev_c[:, c:]                                  # x[2t-1]

    # ---- circular conv as two K-stacked MXU matmuls (K = 3C) -----------------
    #   y[2t]   = x[2t-2]@W0 + x[2t-1]@W1 + x[2t]@W2   + b
    #   y[2t+1] = x[2t-1]@W0 + x[2t]@W1   + x[2t+1]@W2 + b
    cat_e = jnp.concatenate([prev_c, xe], axis=-1)        # (M, 3C) = [x[2t-2]|x[2t-1]|x[2t]]
    cat_o = jnp.concatenate([xo_p, xt_c], axis=-1)        # (M, 3C) = [x[2t-1]|x[2t]|x[2t+1]]
    w = w_ref[...]                                        # (3C, C) = [W0; W1; W2], BN-folded
    bias = jnp.broadcast_to(b_ref[...], (m, c))           # hoisted once, reused twice
    ae = jnp.dot(cat_e, w, preferred_element_type=jnp.float32) + bias
    ao = jnp.dot(cat_o, w, preferred_element_type=jnp.float32) + bias

    # ---- ELU (alpha=1); exp runs on the EUP slot ------------------------------
    # exp(min(v,0))-1 instead of expm1 (proven Mosaic lowering); abs divergence
    # vs. the expm1 reference is < 1e-7 near 0-.
    def elu(v):
        return jnp.where(v > 0, v, jnp.exp(jnp.minimum(v, 0.0)) - 1.0)

    ae = elu(ae)
    ao = elu(ao)

    # ---- MaxPool1d(kernel=3, stride=2, padding=1) over the length-(L+2) conv output
    # out[t]  = max(y[2t-1], y[2t], y[2t+1]) = max(ao[t-1], ae[t], ao[t]),  t < Lh
    # out[Lh] = max(ao[Lh-1], y[L], y[L+1])  = max(ao[Lh-1], ae[0], ao[0])  (circular pad)
    aoc = pltpu.roll(ao, shift=1, axis=0)                 # ao[t-1]; batch-start rows masked below
    ao_prev = jnp.where(seq_c == 0, -jnp.inf, aoc)        # -inf left pad of the pool
    main = jnp.maximum(jnp.maximum(ae, ao), ao_prev)      # (M, C)

    main3 = main.reshape(tb, lh, c)
    ao3 = ao.reshape(tb, lh, c)
    o_ref[:, 0:lh, :] = main3.astype(o_ref.dtype)                          # lane-dense slab
    last = jnp.maximum(main3[:, 0:1, :], ao3[:, lh - 1:lh, :])             # out[Lh] per batch
    o_ref[:, lh:lh + 1, :] = last.astype(o_ref.dtype)                      # single masked row


def _pick_block_b(batch, lh, in_row_bytes, out_row_bytes,
                  target_rows=512, vmem_tile_cap=8 * 1024 * 1024):
    """Batch elements per grid step: grow M = tb*lh to fill the MXU while keeping
    double-buffered per-step tiles inside a v7x-safe (64 MiB physical VMEM) budget."""
    if lh % 8:                      # keep in-kernel (tb*lh,C) <-> (tb,lh,C) reshapes free
        return 1
    divisors = [d for d in range(1, batch + 1) if batch % d == 0]

    def step_bytes(t):              # 2x (double-buffered) input + output tiles
        return 2 * t * (lh * in_row_bytes + (lh + 1) * out_row_bytes)

    fits = [d for d in divisors if step_bytes(d) <= vmem_tile_cap] or [1]
    big = [d for d in fits if d * lh >= target_rows]
    tb = big[0] if big else fits[-1]
    # v7x has 2 TensorCores: prefer >= 2 grid steps if M stays reasonably large.
    if batch // tb < 2:
        alt = [d for d in fits if batch // d >= 2 and d * lh >= target_rows // 2]
        if alt:
            tb = alt[-1]
    return tb


def conv_layer_pallas(x, params, *, matmul_dtype=jnp.bfloat16, block_b=None):
    """ConvLayer forward: circular Conv1d(k=3,pad=2) -> BatchNorm1d(eval) -> ELU
    -> MaxPool1d(k=3,s=2,pad=1).  Channels-last: (B, L, C) -> (B, L//2 + 1, C)."""
    B, L, C = x.shape
    assert L % 2 == 0, "sequence length must be even"
    assert C % 128 == 0, "c_in must be a multiple of 128 (TPU lane width)"
    lh, lp = L // 2, L // 2 + 1

    # Fold eval-mode BatchNorm1d into the conv weight / bias (per output channel).
    # TODO(synk): training-mode batch statistics are not computed in-kernel.
    scale = params["bn_weight"] * jax.lax.rsqrt(params["bn_var"] + params["bn_eps"])
    shift = params["bn_bias"] - params["bn_mean"] * scale
    wf = (params["w"] * scale[None, None, :]).reshape(3 * C, C).astype(matmul_dtype)
    bf = (params["b"] * scale + shift)[None, :].astype(jnp.float32)          # (1, C)

    # Pack adjacent (even, odd) sequence positions onto the lane axis:
    # (B, L, C) -> (B, L/2, 2C).  Contiguous reshape: no HBM copy, one DMA stream
    # (replaces the previous wrapper-side x[:,0::2,:] / x[:,1::2,:] strided copies).
    xp = x.reshape(B, lh, 2 * C)

    in_row = 2 * C * x.dtype.itemsize
    out_row = C * x.dtype.itemsize
    tb = block_b if block_b is not None else _pick_block_b(B, lh, in_row, out_row)
    assert B % tb == 0, (B, tb)
    nb = B // tb

    weight_bytes = wf.size * wf.dtype.itemsize + bf.size * bf.dtype.itemsize
    step_bytes = 2 * tb * (lh * in_row + lp * out_row) + 2 * weight_bytes
    scratch_est = 16 * tb * lh * C * 4            # in-kernel f32/bf16 temporaries
    vmem_limit = int(min(48 << 20, max(8 << 20, 2 * (step_bytes + scratch_est))))

    flops = int(12 * B * lh * C * C)              # two (M,3C)@(3C,C) matmuls per step
    transcendentals = int(2 * B * lh * C)         # one exp per ELU element
    bytes_accessed = int(x.size * x.dtype.itemsize + weight_bytes
                         + B * lp * C * x.dtype.itemsize)

    return pl.pallas_call(
        conv_layer_kernel,
        out_shape=jax.ShapeDtypeStruct((B, lp, C), x.dtype),
        grid=(nb,),
        in_specs=[
            pl.BlockSpec((tb, lh, 2 * C), lambda b: (b, 0, 0)),   # packed activations
            # Grid-invariant weights / bias (constant index_map -> fetched once;
            # at these sizes default double-buffering costs <100 KiB, so we skip
            # pipeline_mode=pl.Buffered(1); add it for very large C on v7x).
            pl.BlockSpec((3 * C, C), lambda b: (0, 0)),
            pl.BlockSpec((1, C), lambda b: (0, 0)),
        ],
        out_specs=pl.BlockSpec((tb, lp, C), lambda b: (b, 0, 0)),
        compiler_params=pltpu.CompilerParams(
            dimension_semantics=("parallel",),
            vmem_limit_bytes=vmem_limit),
        cost_estimate=pl.CostEstimate(
            flops=flops, transcendentals=transcendentals,
            bytes_accessed=bytes_accessed),
    )(xp, wf, bf)


# ----- pure-JAX reference (mirrors the PyTorch forward; correctness check only) -----
def conv_layer_ref(x, params):
    B, L, C = x.shape
    w, b = params["w"], params["b"]
    Lc = L + 2
    # circular pad=2 along the sequence axis, then 'valid' cross-correlation
    xp = jnp.concatenate([x[:, -2:, :], x, x[:, :2, :]], axis=1)      # (B, L+4, C)
    y = b[None, None, :] + sum(
        jnp.einsum("blc,cd->bld", xp[:, k:k + Lc, :], w[k]) for k in range(KERNEL_SIZE))
    # BatchNorm1d (eval)
    scale = params["bn_weight"] / jnp.sqrt(params["bn_var"] + params["bn_eps"])
    shift = params["bn_bias"] - params["bn_mean"] * scale
    y = y * scale[None, None, :] + shift[None, None, :]
    # ELU
    y = jnp.where(y > 0, y, jnp.expm1(y))
    # MaxPool1d(kernel=3, stride=2, padding=1), padding value -inf
    yp = jnp.pad(y, ((0, 0), (1, 1), (0, 0)), constant_values=-jnp.inf)
    Lp = (Lc + 2 - 3) // 2 + 1
    return jnp.stack(
        [jnp.max(yp[:, 2 * m:2 * m + 3, :], axis=1) for m in range(Lp)], axis=1)


if __name__ == "__main__":
    key = jax.random.PRNGKey(0)
    ks = jax.random.split(key, 8)

    B, L, C = 2, 32, 128                      # c_in = 128 -> lane-dense channels
    bound = 1.0 / (C * KERNEL_SIZE) ** 0.5    # Conv1d default uniform init bound

    params = dict(
        # conv weight stored channels-last: w[k, c_in, c_out]
        w=jax.random.uniform(ks[0], (KERNEL_SIZE, C, C), jnp.float32,
                             minval=-bound, maxval=bound),
        b=jax.random.uniform(ks[1], (C,), jnp.float32, minval=-bound, maxval=bound),
        # BatchNorm1d (eval-mode) parameters / running statistics
        bn_weight=jax.random.uniform(ks[2], (C,), jnp.float32, minval=0.5, maxval=1.5),
        bn_bias=jax.random.normal(ks[3], (C,), jnp.float32) * 0.1,
        bn_mean=jax.random.normal(ks[4], (C,), jnp.float32) * 0.1,
        bn_var=jax.random.uniform(ks[5], (C,), jnp.float32, minval=0.5, maxval=1.5),
        bn_eps=1e-5,
    )

    x = jax.random.normal(ks[6], (B, L, C), jnp.float32)
    ref = conv_layer_ref(x, params)

    # Exactness check: f32 matmul path.
    out_f32 = jax.block_until_ready(conv_layer_pallas(x, params, matmul_dtype=jnp.float32))
    assert out_f32.shape == (B, L // 2 + 1, C), out_f32.shape
    err32 = float(jnp.max(jnp.abs(out_f32 - ref)))
    assert jnp.allclose(out_f32, ref, atol=1e-3, rtol=1e-3), err32

    # Default fast path: bf16 MXU inputs, f32 accumulation (looser tolerance).
    out_bf16 = jax.block_until_ready(conv_layer_pallas(x, params))
    assert out_bf16.shape == (B, L // 2 + 1, C), out_bf16.shape
    errbf = float(jnp.max(jnp.abs(out_bf16 - ref)))
    assert jnp.allclose(out_bf16, ref, atol=5e-2, rtol=5e-2), errbf

    print("KERNEL_OK")
</pallas_src>

<mosaic_0001>
module attributes {stable_mosaic.version = 11 : i64} {
  func.func @conv_layer_kernel(%arg0: i32, %arg1: memref<2x16x256xf32, #tpu.memory_space<vmem>>, %arg2: memref<384x128xf32, #tpu.memory_space<vmem>>, %arg3: memref<1x128xf32, #tpu.memory_space<vmem>>, %arg4: memref<2x17x128xf32, #tpu.memory_space<vmem>>) attributes {dimension_semantics = [#tpu.dimension_semantics<parallel>], iteration_bounds = array<i64: 1>, scalar_prefetch = 0 : i64, scratch_operands = 0 : i64, tpu.core_type = #tpu.core_type<tc>, window_params = [{transform_indices = @transform_0, window_bounds = array<i64: 2, 16, 256>}, {pipeline_mode = #tpu.pipeline_mode<synchronous>, transform_indices = @transform_1, window_bounds = array<i64: 384, 128>}, {pipeline_mode = #tpu.pipeline_mode<synchronous>, transform_indices = @transform_2, window_bounds = array<i64: 1, 128>}, {transform_indices = @transform_3, window_bounds = array<i64: 2, 17, 128>}]} {
    %c0 = arith.constant 0 : index
    %c0_0 = arith.constant 0 : index
    %c0_1 = arith.constant 0 : index
    %0 = vector.load %arg1[%c0, %c0_0, %c0_1] : memref<2x16x256xf32, #tpu.memory_space<vmem>>, vector<2x16x256xf32>
    %1 = vector.shape_cast %0 : vector<2x16x256xf32> to vector<32x256xf32>
    %c1_i32 = arith.constant 1 : i32
    %2 = tpu.dynamic_rotate %1 by %c1_i32 dim 0 : vector<32x256xf32>, i32 -> vector<32x256xf32>
    %3 = tpu.iota {dimensions = array<i32: 1>} : vector<2x16x256xi32>
    %4 = vector.shape_cast %3 : vector<2x16x256xi32> to vector<32x256xi32>
    %c17_i32 = arith.constant 17 : i32
    %5 = tpu.dynamic_rotate %1 by %c17_i32 dim 0 : vector<32x256xf32>, i32 -> vector<32x256xf32>
    %c0_i32 = arith.constant 0 : i32
    %6 = vector.broadcast %c0_i32 : i32 to vector<32x256xi32>
    %7 = arith.cmpi eq, %4, %6 : vector<32x256xi32>
    %8 = arith.select %7, %5, %2 : vector<32x256xi1>, vector<32x256xf32>
    %9 = vector.extract_strided_slice %4 {offsets = [0, 0], sizes = [32, 128], strides = [1, 1]} : vector<32x256xi32> to vector<32x128xi32>
    %10 = vector.extract_strided_slice %1 {offsets = [0, 0], sizes = [32, 128], strides = [1, 1]} : vector<32x256xf32> to vector<32x128xf32>
    %11 = vector.extract_strided_slice %8 {offsets = [0, 128], sizes = [32, 128], strides = [1, 1]} : vector<32x256xf32> to vector<32x128xf32>
    %12 = tpu.concatenate %8, %10 in 1 : vector<32x256xf32>, vector<32x128xf32> -> vector<32x384xf32>
    %13 = tpu.concatenate %11, %1 in 1 : vector<32x128xf32>, vector<32x256xf32> -> vector<32x384xf32>
    %c0_2 = arith.constant 0 : index
    %c0_3 = arith.constant 0 : index
    %14 = vector.load %arg2[%c0_2, %c0_3] : memref<384x128xf32, #tpu.memory_space<vmem>>, vector<384x128xf32>
    %c0_4 = arith.constant 0 : index
    %c0_5 = arith.constant 0 : index
    %15 = vector.load %arg3[%c0_4, %c0_5] : memref<1x128xf32, #tpu.memory_space<vmem>>, vector<1x128xf32>
    %16 = vector.shape_cast %15 : vector<1x128xf32> to vector<1x128xf32>
    %17 = vector.broadcast %16 : vector<1x128xf32> to vector<32x128xf32>
    %cst = arith.constant dense<0.000000e+00> : vector<32x128xf32>
    %18 = tpu.matmul %12, %14, %cst {dimension_numbers = #tpu.dot_dimension_numbers<[1], [0], [0], [1], [0, 0, 1, 1], [], []>} : vector<32x384xf32>, vector<384x128xf32>, vector<32x128xf32> -> vector<32x128xf32>
    %19 = arith.addf %18, %17 : vector<32x128xf32>
    %cst_6 = arith.constant dense<0.000000e+00> : vector<32x128xf32>
    %20 = tpu.matmul %13, %14, %cst_6 {dimension_numbers = #tpu.dot_dimension_numbers<[1], [0], [0], [1], [0, 0, 1, 1], [], []>} : vector<32x384xf32>, vector<384x128xf32>, vector<32x128xf32> -> vector<32x128xf32>
    %21 = arith.addf %20, %17 : vector<32x128xf32>
    %cst_7 = arith.constant 0.000000e+00 : f32
    %22 = vector.broadcast %cst_7 : f32 to vector<32x128xf32>
    %23 = arith.cmpf ogt, %19, %22 : vector<32x128xf32>
    %cst_8 = arith.constant 0.000000e+00 : f32
    %24 = vector.broadcast %cst_8 : f32 to vector<32x128xf32>
    %25 = arith.minimumf %19, %24 : vector<32x128xf32>
    %26 = math.exp %25 : vector<32x128xf32>
    %cst_9 = arith.constant 1.000000e+00 : f32
    %27 = vector.broadcast %cst_9 : f32 to vector<32x128xf32>
    %28 = arith.subf %26, %27 : vector<32x128xf32>
    %29 = arith.select %23, %19, %28 : vector<32x128xi1>, vector<32x128xf32>
    %cst_10 = arith.constant 0.000000e+00 : f32
    %30 = vector.broadcast %cst_10 : f32 to vector<32x128xf32>
    %31 = arith.cmpf ogt, %21, %30 : vector<32x128xf32>
    %cst_11 = arith.constant 0.000000e+00 : f32
    %32 = vector.broadcast %cst_11 : f32 to vector<32x128xf32>
    %33 = arith.minimumf %21, %32 : vector<32x128xf32>
    %34 = math.exp %33 : vector<32x128xf32>
    %cst_12 = arith.constant 1.000000e+00 : f32
    %35 = vector.broadcast %cst_12 : f32 to vector<32x128xf32>
    %36 = arith.subf %34, %35 : vector<32x128xf32>
    %37 = arith.select %31, %21, %36 : vector<32x128xi1>, vector<32x128xf32>
    %c1_i32_13 = arith.constant 1 : i32
    %38 = tpu.dynamic_rotate %37 by %c1_i32_13 dim 0 : vector<32x128xf32>, i32 -> vector<32x128xf32>
    %c0_i32_14 = arith.constant 0 : i32
    %39 = vector.broadcast %c0_i32_14 : i32 to vector<32x128xi32>
    %40 = arith.cmpi eq, %9, %39 : vector<32x128xi32>
    %cst_15 = arith.constant 0xFF800000 : f32
    %41 = vector.broadcast %cst_15 : f32 to vector<32x128xf32>
    %42 = arith.select %40, %41, %38 : vector<32x128xi1>, vector<32x128xf32>
    %43 = arith.maximumf %29, %37 : vector<32x128xf32>
    %44 = arith.maximumf %43, %42 : vector<32x128xf32>
    %45 = vector.shape_cast %44 : vector<32x128xf32> to vector<2x16x128xf32>
    %46 = vector.shape_cast %37 : vector<32x128xf32> to vector<2x16x128xf32>
    %c0_16 = arith.constant 0 : index
    %c0_17 = arith.constant 0 : index
    %c0_18 = arith.constant 0 : index
    %47 = vector.load %arg4[%c0_16, %c0_17, %c0_18] : memref<2x17x128xf32, #tpu.memory_space<vmem>>, vector<2x16x128xf32>
    tpu.vector_store %arg4[%c0_16, %c0_17, %c0_18], %45 {strides = array<i32>} : memref<2x17x128xf32, #tpu.memory_space<vmem>>, vector<2x16x128xf32>,
    %48 = vector.extract_strided_slice %45 {offsets = [0, 0, 0], sizes = [2, 1, 128], strides = [1, 1, 1]} : vector<2x16x128xf32> to vector<2x1x128xf32>
    %49 = vector.extract_strided_slice %46 {offsets = [0, 15, 0], sizes = [2, 1, 128], strides = [1, 1, 1]} : vector<2x16x128xf32> to vector<2x1x128xf32>
    %50 = arith.maximumf %48, %49 : vector<2x1x128xf32>
    %c0_19 = arith.constant 0 : index
    %c16 = arith.constant 16 : index
    %c0_20 = arith.constant 0 : index
    %51 = vector.load %arg4[%c0_19, %c16, %c0_20] : memref<2x17x128xf32, #tpu.memory_space<vmem>>, vector<2x1x128xf32>
    tpu.vector_store %arg4[%c0_19, %c16, %c0_20], %50 {strides = array<i32>} : memref<2x17x128xf32, #tpu.memory_space<vmem>>, vector<2x1x128xf32>,
    return
  }
  func.func @transform_0(%arg0: i32) -> (i32, i32, i32) {
    %c0_i32 = arith.constant 0 : i32
    %c0_i32_0 = arith.constant 0 : i32
    %c0_i32_1 = arith.constant 0 : i32
    return %arg0, %c0_i32, %c0_i32_0 : i32, i32, i32
  }
  func.func @transform_1(%arg0: i32) -> (i32, i32) {
    %c0_i32 = arith.constant 0 : i32
    %c0_i32_0 = arith.constant 0 : i32
    %c0_i32_1 = arith.constant 0 : i32
    return %c0_i32, %c0_i32_0 : i32, i32
  }
  func.func @transform_2(%arg0: i32) -> (i32, i32) {
    %c0_i32 = arith.constant 0 : i32
    %c0_i32_0 = arith.constant 0 : i32
    %c0_i32_1 = arith.constant 0 : i32
    return %c0_i32, %c0_i32_0 : i32, i32
  }
  func.func @transform_3(%arg0: i32) -> (i32, i32, i32) {
    %c0_i32 = arith.constant 0 : i32
    %c0_i32_0 = arith.constant 0 : i32
    %c0_i32_1 = arith.constant 0 : i32
    return %arg0, %c0_i32, %c0_i32_0 : i32, i32, i32
  }
}

</mosaic_0001>

<llo_original>
// kernel: tpu_custom_call.1
$region0: #{tpu_custom_call.1}
  #allocation0 [shape = 'u32[]', space=smem, size = 0x4, offset = 0x4, fixed_abs, tag = 'smem constant byte address 0x4 - core index']
  #allocation1 [shape = 'u32[144,128]{1,0:T(1,128)}', space=vmem, size = 0x12000, scoped, tag = 'internal scratch']
  %s0 = inlined_call_operand.hbm [shape: f32[2,16,256], index: 0, kind: input, shape index: {}]
  %s1 = inlined_call_operand.hbm [shape: f32[384,128], index: 1, kind: input, shape index: {}]
  %s2 = inlined_call_operand.vmem [shape: f32[1,128], index: 2, kind: input, shape index: {}]
  %s3 = inlined_call_operand.vmem [shape: f32[2,17,128], index: 3, kind: output, shape index: {}]
  %s4 = sld [smem:[#allocation0]]
  $region30: #{tpu_custom_call.1} parent=0
    _
  %s6 = ssub.s32 1, %s4
  %s7 = scalar_select 0, %s6, %s4
  $region1: #{tpu_custom_call.1} parent=0
    #allocation2 [shape = 'u8[32768]{0}', space=vmem, size = 0x8000, scoped, tag = 'input window, operand 0, single buffered']
    #allocation3 [shape = 's32[1]{0}', space=sflag, size = 0x4, scoped, tag = 'scoped memory for tpu_custom_call.1']
    #allocation4 [shape = 'u8[196608]{0}', space=vmem, size = 0x30000, scoped, tag = 'input window, operand 1, single buffered']
    #allocation5 [shape = 's32[1]{0}', space=sflag, size = 0x4, scoped, tag = 'scoped memory for tpu_custom_call.1']
    %8 = vsyncpa [#allocation3], 0
    %9 = vsyncpa [#allocation5], 0
    // Predicated region
    $region2: #{tpu_custom_call.1} parent=1 // pred_check
      _
    $region3: #{tpu_custom_call.1} parent=1 // pred_check_branch
      %11 = sbr.rel (0) target = $region5
    $region4: #{tpu_custom_call.1} parent=1 // pred_region
      %s13 = ssub.s32 1024, 1024
      %14 = vsyncadd [#allocation3], %s13
      %s15 = sshll.u32 [#allocation2], 4
      %s16 = int_to_ptr.vmem [resolvable:$true] %s15
      %21 = dma.hbm_to_vmem [thread:$0]  %s0, 1024, %s16, [#allocation3], 256, 256, 16
    $region5: #{tpu_custom_call.1} parent=1 // pred_fallthru
      _
    // Predicated region
    $region6: #{tpu_custom_call.1} parent=1 // pred_check
      _
    $region7: #{tpu_custom_call.1} parent=1 // pred_check_branch
      %23 = sbr.rel (0) target = $region9
    $region8: #{tpu_custom_call.1} parent=1 // pred_region
      %s25 = ssub.s32 6144, 6144
      %26 = vsyncadd [#allocation5], %s25
      %s27 = sshll.u32 [#allocation4], 4
      %s28 = int_to_ptr.vmem [resolvable:$true] %s27
      %33 = dma.hbm_to_vmem [thread:$0]  %s1, 6144, %s28, [#allocation5], 128, 128, 8
    $region9: #{tpu_custom_call.1} parent=1 // pred_fallthru
      _
    // Predicated region
    $region10: #{tpu_custom_call.1} parent=1 // pred_check
      _
    $region11: #{tpu_custom_call.1} parent=1 // pred_check_branch
      %35 = sbr.rel (0) target = $region13
    $region12: #{tpu_custom_call.1} parent=1 // pred_region
      _
    $region13: #{tpu_custom_call.1} parent=1 // pred_fallthru
      _
    // Predicated region
    $region14: #{tpu_custom_call.1} parent=1 // pred_check
      _
    $region15: #{tpu_custom_call.1} parent=1 // pred_check_branch
      %37 = sbr.rel (0) target = $region17
    $region16: #{tpu_custom_call.1} parent=1 // pred_region
      %38 = dma.done [#allocation3], 1024
    $region17: #{tpu_custom_call.1} parent=1 // pred_fallthru
      _
    // Predicated region
    $region18: #{tpu_custom_call.1} parent=1 // pred_check
      _
    $region19: #{tpu_custom_call.1} parent=1 // pred_check_branch
      %40 = sbr.rel (0) target = $region21
    $region20: #{tpu_custom_call.1} parent=1 // pred_region
      %41 = dma.done [#allocation5], 6144
    $region21: #{tpu_custom_call.1} parent=1 // pred_fallthru
      _
    %v42 = vld [vmem:[#allocation2] sm:$0xff]
    %v43 = vld [vmem:[#allocation2 + $0x8] sm:$0xff]
    %v44 = vld [vmem:[#allocation2 + $0x10] sm:$0xff]
    %v45 = vld [vmem:[#allocation2 + $0x18] sm:$0xff]
    %v46 = vld [vmem:[#allocation2 + $0x20] sm:$0xff]
    %v47 = vld [vmem:[#allocation2 + $0x28] sm:$0xff]
    %v48 = vld [vmem:[#allocation2 + $0x30] sm:$0xff]
    %v49 = vld [vmem:[#allocation2 + $0x38] sm:$0xff]
    %v50 = vrot.slane %v42, 7
    %v51 = vrot.slane %v43, 7
    %v52 = vrot.slane %v44, 7
    %v53 = vrot.slane %v45, 7
    %v54 = vrot.slane %v46, 7
    %v55 = vrot.slane %v47, 7
    %v56 = vrot.slane %v48, 7
    %v57 = vrot.slane %v49, 7
    %v58 = vlaneseq
    %v59 = vshrl.u32 %v58, 7
    %vm60 = vcmp.lt.s32.totalorder %v59, 1
    %v61 = vsel %vm60, %v54, %v56
    %v62 = vsel %vm60, %v55, %v57
    %v63 = vsel %vm60, %v52, %v54
    %v64 = vsel %vm60, %v53, %v55
    %v65 = vsel %vm60, %v50, %v52
    %v66 = vsel %vm60, %v51, %v53
    %v67 = vsel %vm60, %v56, %v50
    %v68 = vsel %vm60, %v57, %v51
    %v69 = vadd.s32 %v59, 8
    %vm70 = vcmp.eq.s32.totalorder %v59, 0
    %vm71 = vcmp.eq.s32.totalorder %v69, 0
    %v72 = vsel %vm70, %v63, %v67
    %v73 = vsel %vm70, %v64, %v68
    %v74 = vsel %vm71, %v61, %v65
    %v75 = vsel %vm71, %v62, %v66
    %v76 = vsel %vm70, %v67, %v63
    %v77 = vsel %vm70, %v68, %v64
    %v78 = vsel %vm71, %v65, %v61
    %v79 = vsel %vm71, %v66, %v62
    %v80 = vld [vmem:[#allocation4] sm:$0xff]
    %v81 = vld [vmem:[#allocation4 + $0x8] sm:$0xff]
    %v82 = vld [vmem:[#allocation4 + $0x10] sm:$0xff]
    %v83 = vld [vmem:[#allocation4 + $0x18] sm:$0xff]
    %v84 = vld [vmem:[#allocation4 + $0x20] sm:$0xff]
    %v85 = vld [vmem:[#allocation4 + $0x28] sm:$0xff]
    %v86 = vld [vmem:[#allocation4 + $0x30] sm:$0xff]
    %v87 = vld [vmem:[#allocation4 + $0x38] sm:$0xff]
    %v88 = vld [vmem:[#allocation4 + $0x40] sm:$0xff]
    %v89 = vld [vmem:[#allocation4 + $0x48] sm:$0xff]
    %v90 = vld [vmem:[#allocation4 + $0x50] sm:$0xff]
    %v91 = vld [vmem:[#allocation4 + $0x58] sm:$0xff]
    %v92 = vld [vmem:[#allocation4 + $0x60] sm:$0xff]
    %v93 = vld [vmem:[#allocation4 + $0x68] sm:$0xff]
    %v94 = vld [vmem:[#allocation4 + $0x70] sm:$0xff]
    %v95 = vld [vmem:[#allocation4 + $0x78] sm:$0xff]
    %v96 = vld [vmem:[#allocation4 + $0x80] sm:$0xff]
    %v97 = vld [vmem:[#allocation4 + $0x88] sm:$0xff]
    %v98 = vld [vmem:[#allocation4 + $0x90] sm:$0xff]
    %v99 = vld [vmem:[#allocation4 + $0x98] sm:$0xff]
    %v100 = vld [vmem:[#allocation4 + $0xa0] sm:$0xff]
    %v101 = vld [vmem:[#allocation4 + $0xa8] sm:$0xff]
    %v102 = vld [vmem:[#allocation4 + $0xb0] sm:$0xff]
    %v103 = vld [vmem:[#allocation4 + $0xb8] sm:$0xff]
    %v104 = vld [vmem:[#allocation4 + $0xc0] sm:$0xff]
    %v105 = vld [vmem:[#allocation4 + $0xc8] sm:$0xff]
    %v106 = vld [vmem:[#allocation4 + $0xd0] sm:$0xff]
    %v107 = vld [vmem:[#allocation4 + $0xd8] sm:$0xff]
    %v108 = vld [vmem:[#allocation4 + $0xe0] sm:$0xff]
    %v109 = vld [vmem:[#allocation4 + $0xe8] sm:$0xff]
    %v110 = vld [vmem:[#allocation4 + $0xf0] sm:$0xff]
    %v111 = vld [vmem:[#allocation4 + $0xf8] sm:$0xff]
    %v112 = vld [vmem:[#allocation4 + $0x100] sm:$0xff]
    %v113 = vld [vmem:[#allocation4 + $0x108] sm:$0xff]
    %v114 = vld [vmem:[#allocation4 + $0x110] sm:$0xff]
    %v115 = vld [vmem:[#allocation4 + $0x118] sm:$0xff]
    %v116 = vld [vmem:[#allocation4 + $0x120] sm:$0xff]
    %v117 = vld [vmem:[#allocation4 + $0x128] sm:$0xff]
    %v118 = vld [vmem:[#allocation4 + $0x130] sm:$0xff]
    %v119 = vld [vmem:[#allocation4 + $0x138] sm:$0xff]
    %v120 = vld [vmem:[#allocation4 + $0x140] sm:$0xff]
    %v121 = vld [vmem:[#allocation4 + $0x148] sm:$0xff]
    %v122 = vld [vmem:[#allocation4 + $0x150] sm:$0xff]
    %v123 = vld [vmem:[#allocation4 + $0x158] sm:$0xff]
    %v124 = vld [vmem:[#allocation4 + $0x160] sm:$0xff]
    %v125 = vld [vmem:[#allocation4 + $0x168] sm:$0xff]
    %v126 = vld [vmem:[#allocation4 + $0x170] sm:$0xff]
    %v127 = vld [vmem:[#allocation4 + $0x178] sm:$0xff]
    %v128 = vld [vmem:[%s2] sm:$0x1]
    %v130 = vlaneseq
    %v131 = vshrl.u32 %v130, 7
    %v132 = vsub.s32 0, %v131
    %v133 = vrot.slane %v128, %v132
    %135 = vmatprep.subr.mxu0 0.0
    %136 = vmatpush1.msra.mxu0 %v95
    %137 = vmatprep.subr.mxu0 0.0
    %138 = vmatpush1.msra.mxu0 %v94
    %139 = vmatprep.subr.mxu0 0.0
    %140 = vmatpush1.msra.mxu0 %v93
    %141 = vmatprep.subr.mxu0 0.0
    %142 = vmatpush1.msra.mxu0 %v92
    %143 = vmatprep.subr.mxu0 0.0
    %144 = vmatpush1.msra.mxu0 %v91
    %145 = vmatprep.subr.mxu0 0.0
    %146 = vmatpush1.msra.mxu0 %v90
    %147 = vmatprep.subr.mxu0 0.0
    %148 = vmatpush1.msra.mxu0 %v89
    %149 = vmatprep.subr.mxu0 0.0
    %150 = vmatpush1.msra.mxu0 %v88
    %151 = vmatprep.subr.mxu0 0.0
    %152 = vmatpush1.msra.mxu0 %v87
    %153 = vmatprep.subr.mxu0 0.0
    %154 = vmatpush1.msra.mxu0 %v86
    %155 = vmatprep.subr.mxu0 0.0
    %156 = vmatpush1.msra.mxu0 %v85
    %157 = vmatprep.subr.mxu0 0.0
    %158 = vmatpush1.msra.mxu0 %v84
    %159 = vmatprep.subr.mxu0 0.0
    %160 = vmatpush1.msra.mxu0 %v83
    %161 = vmatprep.subr.mxu0 0.0
    %162 = vmatpush1.msra.mxu0 %v82
    %163 = vmatprep.subr.mxu0 0.0
    %164 = vmatpush1.msra.mxu0 %v81
    %165 = vmatprep.subr.mxu0 0.0
    %166 = vmatpush1.msra.mxu0 %v80
    %167 = vmatprep.subr.mxu0 0.0
    %168 = vmatpush2.msra.mxu0 %v111
    %169 = vmatprep.subr.mxu0 0.0
    %170 = vmatpush2.msra.mxu0 %v110
    %171 = vmatprep.subr.mxu0 0.0
    %172 = vmatpush2.msra.mxu0 %v109
    %173 = vmatprep.subr.mxu0 0.0
    %174 = vmatpush2.msra.mxu0 %v108
    %175 = vmatprep.subr.mxu0 0.0
    %176 = vmatpush2.msra.mxu0 %v107
    %177 = vmatprep.subr.mxu0 0.0
    %178 = vmatpush2.msra.mxu0 %v106
    %179 = vmatprep.subr.mxu0 0.0
    %180 = vmatpush2.msra.mxu0 %v105
    %181 = vmatprep.subr.mxu0 0.0
    %182 = vmatpush2.msra.mxu0 %v104
    %183 = vmatprep.subr.mxu0 0.0
    %184 = vmatpush2.msra.mxu0 %v103
    %185 = vmatprep.subr.mxu0 0.0
    %186 = vmatpush2.msra.mxu0 %v102
    %187 = vmatprep.subr.mxu0 0.0
    %188 = vmatpush2.msra.mxu0 %v101
    %189 = vmatprep.subr.mxu0 0.0
    %190 = vmatpush2.msra.mxu0 %v100
    %191 = vmatprep.subr.mxu0 0.0
    %192 = vmatpush2.msra.mxu0 %v99
    %193 = vmatprep.subr.mxu0 0.0
    %194 = vmatpush2.msra.mxu0 %v98
    %195 = vmatprep.subr.mxu0 0.0
    %196 = vmatpush2.msra.mxu0 %v97
    %197 = vmatprep.subr.mxu0 0.0
    %198 = vmatpush2.msra.mxu0 %v96
    %199 = vmatprep.mubr.f32.mxu0 %v73
    %200 = vmatmul.mubr.f32.gmra.mxu0 %v72
    %v201 = vpop.f32.mrf.mxu0
    %v202 = vadd.f32 %v133, %v201
    %v203 = vpop.f32.mrf.mxu0
    %204 = vmatprep.mubr.f32.mxu0 %v75
    %205 = vmatmul.mubr.f32.gmra.mxu0 %v74
    %v206 = vpop.f32.mrf.mxu0
    %v207 = vadd.f32 %v133, %v206
    %v208 = vpop.f32.mrf.mxu0
    %209 = vmatprep.mubr.f32.mxu0 %v77
    %210 = vmatmul.mubr.f32.gmra.mxu0 %v76
    %v211 = vpop.f32.mrf.mxu0
    %v212 = vadd.f32 %v133, %v211
    %v213 = vpop.f32.mrf.mxu0
    %214 = vmatprep.mubr.f32.mxu0 %v79
    %215 = vmatmul.mubr.f32.gmra.mxu0 %v78
    %v216 = vpop.f32.mrf.mxu0
    %v217 = vadd.f32 %v133, %v216
    %v218 = vpop.f32.mrf.mxu0
    %219 = vdwg.mxu0
    %220 = vmatprep.subr.mxu0 0.0
    %221 = vmatpush1.msra.mxu0 %v127
    %222 = vmatprep.subr.mxu0 0.0
    %223 = vmatpush1.msra.mxu0 %v126
    %224 = vmatprep.subr.mxu0 0.0
    %225 = vmatpush1.msra.mxu0 %v125
    %226 = vmatprep.subr.mxu0 0.0
    %227 = vmatpush1.msra.mxu0 %v124
    %228 = vmatprep.subr.mxu0 0.0
    %229 = vmatpush1.msra.mxu0 %v123
    %230 = vmatprep.subr.mxu0 0.0
    %231 = vmatpush1.msra.mxu0 %v122
    %232 = vmatprep.subr.mxu0 0.0
    %233 = vmatpush1.msra.mxu0 %v121
    %234 = vmatprep.subr.mxu0 0.0
    %235 = vmatpush1.msra.mxu0 %v120
    %236 = vmatprep.subr.mxu0 0.0
    %237 = vmatpush1.msra.mxu0 %v119
    %238 = vmatprep.subr.mxu0 0.0
    %239 = vmatpush1.msra.mxu0 %v118
    %240 = vmatprep.subr.mxu0 0.0
    %241 = vmatpush1.msra.mxu0 %v117
    %242 = vmatprep.subr.mxu0 0.0
    %243 = vmatpush1.msra.mxu0 %v116
    %244 = vmatprep.subr.mxu0 0.0
    %245 = vmatpush1.msra.mxu0 %v115
    %246 = vmatprep.subr.mxu0 0.0
    %247 = vmatpush1.msra.mxu0 %v114
    %248 = vmatprep.subr.mxu0 0.0
    %249 = vmatpush1.msra.mxu0 %v113
    %250 = vmatprep.subr.mxu0 0.0
    %251 = vmatpush1.msra.mxu0 %v112
    %252 = vmatprep.subr.mxu0 0.0
    %253 = vmatpush2.msra.mxu0 0.0
    %254 = vmatprep.subr.mxu0 0.0
    %255 = vmatpush2.msra.mxu0 0.0
    %256 = vmatprep.subr.mxu0 0.0
    %257 = vmatpush2.msra.mxu0 0.0
    %258 = vmatprep.subr.mxu0 0.0
    %259 = vmatpush2.msra.mxu0 0.0
    %260 = vmatprep.subr.mxu0 0.0
    %261 = vmatpush2.msra.mxu0 0.0
    %262 = vmatprep.subr.mxu0 0.0
    %263 = vmatpush2.msra.mxu0 0.0
    %264 = vmatprep.subr.mxu0 0.0
    %265 = vmatpush2.msra.mxu0 0.0
    %266 = vmatprep.subr.mxu0 0.0
    %267 = vmatpush2.msra.mxu0 0.0
    %268 = vmatprep.subr.mxu0 0.0
    %269 = vmatpush2.msra.mxu0 0.0
    %270 = vmatprep.subr.mxu0 0.0
    %271 = vmatpush2.msra.mxu0 0.0
    %272 = vmatprep.subr.mxu0 0.0
    %273 = vmatpush2.msra.mxu0 0.0
    %274 = vmatprep.subr.mxu0 0.0
    %275 = vmatpush2.msra.mxu0 0.0
    %276 = vmatprep.subr.mxu0 0.0
    %277 = vmatpush2.msra.mxu0 0.0
    %278 = vmatprep.subr.mxu0 0.0
    %279 = vmatpush2.msra.mxu0 0.0
    %280 = vmatprep.subr.mxu0 0.0
    %281 = vmatpush2.msra.mxu0 0.0
    %282 = vmatprep.subr.mxu0 0.0
    %283 = vmatpush2.msra.mxu0 0.0
    %284 = vmatprep.mubr.f32.mxu0 0.0
    %285 = vmatmul.mubr.f32.gmra.mxu0 %v42
    %v286 = vpop.f32.mrf.mxu0
    %v287 = vadd.f32 %v202, %v286
    %v288 = vpop.f32.mrf.mxu0
    %289 = vmatprep.mubr.f32.mxu0 0.0
    %290 = vmatmul.mubr.f32.gmra.mxu0 %v44
    %v291 = vpop.f32.mrf.mxu0
    %v292 = vadd.f32 %v207, %v291
    %v293 = vpop.f32.mrf.mxu0
    %294 = vmatprep.mubr.f32.mxu0 0.0
    %295 = vmatmul.mubr.f32.gmra.mxu0 %v46
    %v296 = vpop.f32.mrf.mxu0
    %v297 = vadd.f32 %v212, %v296
    %v298 = vpop.f32.mrf.mxu0
    %299 = vmatprep.mubr.f32.mxu0 0.0
    %300 = vmatmul.mubr.f32.gmra.mxu0 %v48
    %v301 = vpop.f32.mrf.mxu0
    %v302 = vadd.f32 %v217, %v301
    %v303 = vpop.f32.mrf.mxu0
    %304 = vdwg.mxu0
    %305 = vmatprep.subr.mxu0 0.0
    %306 = vmatpush1.msra.mxu0 %v95
    %307 = vmatprep.subr.mxu0 0.0
    %308 = vmatpush1.msra.mxu0 %v94
    %309 = vmatprep.subr.mxu0 0.0
    %310 = vmatpush1.msra.mxu0 %v93
    %311 = vmatprep.subr.mxu0 0.0
    %312 = vmatpush1.msra.mxu0 %v92
    %313 = vmatprep.subr.mxu0 0.0
    %314 = vmatpush1.msra.mxu0 %v91
    %315 = vmatprep.subr.mxu0 0.0
    %316 = vmatpush1.msra.mxu0 %v90
    %317 = vmatprep.subr.mxu0 0.0
    %318 = vmatpush1.msra.mxu0 %v89
    %319 = vmatprep.subr.mxu0 0.0
    %320 = vmatpush1.msra.mxu0 %v88
    %321 = vmatprep.subr.mxu0 0.0
    %322 = vmatpush1.msra.mxu0 %v87
    %323 = vmatprep.subr.mxu0 0.0
    %324 = vmatpush1.msra.mxu0 %v86
    %325 = vmatprep.subr.mxu0 0.0
    %326 = vmatpush1.msra.mxu0 %v85
    %327 = vmatprep.subr.mxu0 0.0
    %328 = vmatpush1.msra.mxu0 %v84
    %329 = vmatprep.subr.mxu0 0.0
    %330 = vmatpush1.msra.mxu0 %v83
    %331 = vmatprep.subr.mxu0 0.0
    %332 = vmatpush1.msra.mxu0 %v82
    %333 = vmatprep.subr.mxu0 0.0
    %334 = vmatpush1.msra.mxu0 %v81
    %335 = vmatprep.subr.mxu0 0.0
    %336 = vmatpush1.msra.mxu0 %v80
    %337 = vmatprep.subr.mxu0 0.0
    %338 = vmatpush2.msra.mxu0 %v111
    %339 = vmatprep.subr.mxu0 0.0
    %340 = vmatpush2.msra.mxu0 %v110
    %341 = vmatprep.subr.mxu0 0.0
    %342 = vmatpush2.msra.mxu0 %v109
    %343 = vmatprep.subr.mxu0 0.0
    %344 = vmatpush2.msra.mxu0 %v108
    %345 = vmatprep.subr.mxu0 0.0
    %346 = vmatpush2.msra.mxu0 %v107
    %347 = vmatprep.subr.mxu0 0.0
    %348 = vmatpush2.msra.mxu0 %v106
    %349 = vmatprep.subr.mxu0 0.0
    %350 = vmatpush2.msra.mxu0 %v105
    %351 = vmatprep.subr.mxu0 0.0
    %352 = vmatpush2.msra.mxu0 %v104
    %353 = vmatprep.subr.mxu0 0.0
    %354 = vmatpush2.msra.mxu0 %v103
    %355 = vmatprep.subr.mxu0 0.0
    %356 = vmatpush2.msra.mxu0 %v102
    %357 = vmatprep.subr.mxu0 0.0
    %358 = vmatpush2.msra.mxu0 %v101
    %359 = vmatprep.subr.mxu0 0.0
    %360 = vmatpush2.msra.mxu0 %v100
    %361 = vmatprep.subr.mxu0 0.0
    %362 = vmatpush2.msra.mxu0 %v99
    %363 = vmatprep.subr.mxu0 0.0
    %364 = vmatpush2.msra.mxu0 %v98
    %365 = vmatprep.subr.mxu0 0.0
    %366 = vmatpush2.msra.mxu0 %v97
    %367 = vmatprep.subr.mxu0 0.0
    %368 = vmatpush2.msra.mxu0 %v96
    %369 = vmatprep.mubr.f32.mxu0 %v42
    %370 = vmatmul.mubr.f32.gmra.mxu0 %v73
    %v371 = vpop.f32.mrf.mxu0
    %v372 = vadd.f32 %v133, %v371
    %v373 = vpop.f32.mrf.mxu0
    %374 = vmatprep.mubr.f32.mxu0 %v44
    %375 = vmatmul.mubr.f32.gmra.mxu0 %v75
    %v376 = vpop.f32.mrf.mxu0
    %v377 = vadd.f32 %v133, %v376
    %v378 = vpop.f32.mrf.mxu0
    %379 = vmatprep.mubr.f32.mxu0 %v46
    %380 = vmatmul.mubr.f32.gmra.mxu0 %v77
    %v381 = vpop.f32.mrf.mxu0
    %v382 = vadd.f32 %v133, %v381
    %v383 = vpop.f32.mrf.mxu0
    %384 = vmatprep.mubr.f32.mxu0 %v48
    %385 = vmatmul.mubr.f32.gmra.mxu0 %v79
    %v386 = vpop.f32.mrf.mxu0
    %v387 = vadd.f32 %v133, %v386
    %v388 = vpop.f32.mrf.mxu0
    %389 = vdwg.mxu0
    %390 = vmatprep.subr.mxu0 0.0
    %391 = vmatpush1.msra.mxu0 %v127
    %392 = vmatprep.subr.mxu0 0.0
    %393 = vmatpush1.msra.mxu0 %v126
    %394 = vmatprep.subr.mxu0 0.0
    %395 = vmatpush1.msra.mxu0 %v125
    %396 = vmatprep.subr.mxu0 0.0
    %397 = vmatpush1.msra.mxu0 %v124
    %398 = vmatprep.subr.mxu0 0.0
    %399 = vmatpush1.msra.mxu0 %v123
    %400 = vmatprep.subr.mxu0 0.0
    %401 = vmatpush1.msra.mxu0 %v122
    %402 = vmatprep.subr.mxu0 0.0
    %403 = vmatpush1.msra.mxu0 %v121
    %404 = vmatprep.subr.mxu0 0.0
    %405 = vmatpush1.msra.mxu0 %v120
    %406 = vmatprep.subr.mxu0 0.0
    %407 = vmatpush1.msra.mxu0 %v119
    %408 = vmatprep.subr.mxu0 0.0
    %409 = vmatpush1.msra.mxu0 %v118
    %410 = vmatprep.subr.mxu0 0.0
    %411 = vmatpush1.msra.mxu0 %v117
    %412 = vmatprep.subr.mxu0 0.0
    %413 = vmatpush1.msra.mxu0 %v116
    %414 = vmatprep.subr.mxu0 0.0
    %415 = vmatpush1.msra.mxu0 %v115
    %416 = vmatprep.subr.mxu0 0.0
    %417 = vmatpush1.msra.mxu0 %v114
    %418 = vmatprep.subr.mxu0 0.0
    %419 = vmatpush1.msra.mxu0 %v113
    %420 = vmatprep.subr.mxu0 0.0
    %421 = vmatpush1.msra.mxu0 %v112
    %422 = vmatprep.subr.mxu0 0.0
    %423 = vmatpush2.msra.mxu0 0.0
    %424 = vmatprep.subr.mxu0 0.0
    %425 = vmatpush2.msra.mxu0 0.0
    %426 = vmatprep.subr.mxu0 0.0
    %427 = vmatpush2.msra.mxu0 0.0
    %428 = vmatprep.subr.mxu0 0.0
    %429 = vmatpush2.msra.mxu0 0.0
    %430 = vmatprep.subr.mxu0 0.0
    %431 = vmatpush2.msra.mxu0 0.0
    %432 = vmatprep.subr.mxu0 0.0
    %433 = vmatpush2.msra.mxu0 0.0
    %434 = vmatprep.subr.mxu0 0.0
    %435 = vmatpush2.msra.mxu0 0.0
    %436 = vmatprep.subr.mxu0 0.0
    %437 = vmatpush2.msra.mxu0 0.0
    %438 = vmatprep.subr.mxu0 0.0
    %439 = vmatpush2.msra.mxu0 0.0
    %440 = vmatprep.subr.mxu0 0.0
    %441 = vmatpush2.msra.mxu0 0.0
    %442 = vmatprep.subr.mxu0 0.0
    %443 = vmatpush2.msra.mxu0 0.0
    %444 = vmatprep.subr.mxu0 0.0
    %445 = vmatpush2.msra.mxu0 0.0
    %446 = vmatprep.subr.mxu0 0.0
    %447 = vmatpush2.msra.mxu0 0.0
    %448 = vmatprep.subr.mxu0 0.0
    %449 = vmatpush2.msra.mxu0 0.0
    %450 = vmatprep.subr.mxu0 0.0
    %451 = vmatpush2.msra.mxu0 0.0
    %452 = vmatprep.subr.mxu0 0.0
    %453 = vmatpush2.msra.mxu0 0.0
    %454 = vmatprep.mubr.f32.mxu0 0.0
    %455 = vmatmul.mubr.f32.gmra.mxu0 %v43
    %v456 = vpop.f32.mrf.mxu0
    %v457 = vadd.f32 %v372, %v456
    %v458 = vpop.f32.mrf.mxu0
    %459 = vmatprep.mubr.f32.mxu0 0.0
    %460 = vmatmul.mubr.f32.gmra.mxu0 %v45
    %v461 = vpop.f32.mrf.mxu0
    %v462 = vadd.f32 %v377, %v461
    %v463 = vpop.f32.mrf.mxu0
    %464 = vmatprep.mubr.f32.mxu0 0.0
    %465 = vmatmul.mubr.f32.gmra.mxu0 %v47
    %v466 = vpop.f32.mrf.mxu0
    %v467 = vadd.f32 %v382, %v466
    %v468 = vpop.f32.mrf.mxu0
    %469 = vmatprep.mubr.f32.mxu0 0.0
    %470 = vmatmul.mubr.f32.gmra.mxu0 %v49
    %v471 = vpop.f32.mrf.mxu0
    %v472 = vadd.f32 %v387, %v471
    %v473 = vpop.f32.mrf.mxu0
    %474 = vdwg.mxu0
    %vm475 = vcmp.gt.f32.partialorder %v287, 0.0
    %vm476 = vcmp.gt.f32.partialorder %v292, 0.0
    %vm477 = vcmp.gt.f32.partialorder %v297, 0.0
    %vm478 = vcmp.gt.f32.partialorder %v302, 0.0
    %v479 = vmin.f32 %v287, 0.0
    %v480 = vmin.f32 %v292, 0.0
    %v481 = vmin.f32 %v297, 0.0
    %v482 = vmin.f32 %v302, 0.0
    %v483 = vmul.f32 %v479, 1.442695
    %v484 = vpow.pop %v483
    %v485 = vmul.f32 %v480, 1.442695
    %v486 = vpow.pop %v485
    %v487 = vmul.f32 %v481, 1.442695
    %v488 = vpow.pop %v487
    %v489 = vmul.f32 %v482, 1.442695
    %v490 = vpow.pop %v489
    %v491 = vsub.f32 %v484, 1.0
    %v492 = vsub.f32 %v486, 1.0
    %v493 = vsub.f32 %v488, 1.0
    %v494 = vsub.f32 %v490, 1.0
    %v495 = vsel %vm475, %v287, %v491
    %v496 = vsel %vm476, %v292, %v492
    %v497 = vsel %vm477, %v297, %v493
    %v498 = vsel %vm478, %v302, %v494
    %vm499 = vcmp.gt.f32.partialorder %v457, 0.0
    %vm500 = vcmp.gt.f32.partialorder %v462, 0.0
    %vm501 = vcmp.gt.f32.partialorder %v467, 0.0
    %vm502 = vcmp.gt.f32.partialorder %v472, 0.0
    %v503 = vmin.f32 %v457, 0.0
    %v504 = vmin.f32 %v462, 0.0
    %v505 = vmin.f32 %v467, 0.0
    %v506 = vmin.f32 %v472, 0.0
    %v507 = vmul.f32 %v503, 1.442695
    %v508 = vpow.pop %v507
    %v509 = vmul.f32 %v504, 1.442695
    %v510 = vpow.pop %v509
    %v511 = vmul.f32 %v505, 1.442695
    %v512 = vpow.pop %v511
    %v513 = vmul.f32 %v506, 1.442695
    %v514 = vpow.pop %v513
    %v515 = vsub.f32 %v508, 1.0
    %v516 = vsub.f32 %v510, 1.0
    %v517 = vsub.f32 %v512, 1.0
    %v518 = vsub.f32 %v514, 1.0
    %v519 = vsel %vm499, %v457, %v515
    %v520 = vsel %vm500, %v462, %v516
    %v521 = vsel %vm501, %v467, %v517
    %v522 = vsel %vm502, %v472, %v518
    %v523 = vrot.slane %v519, 7
    %v524 = vrot.slane %v520, 7
    %v525 = vrot.slane %v521, 7
    %v526 = vrot.slane %v522, 7
    %v527 = vsel %vm60, %v525, %v526
    %v528 = vsel %vm60, %v524, %v525
    %v529 = vsel %vm60, %v523, %v524
    %v530 = vsel %vm60, %v526, %v523
    %v531 = vsel %vm70, -inf, %v530
    %v532 = vsel %vm71, -inf, %v529
    %v533 = vsel %vm70, -inf, %v528
    %v534 = vsel %vm71, -inf, %v527
    %v535 = vmax.f32 %v495, %v519
    %v536 = vmax.f32 %v496, %v520
    %v537 = vmax.f32 %v497, %v521
    %v538 = vmax.f32 %v498, %v522
    %v539 = vmax.f32 %v535, %v531
    %v540 = vmax.f32 %v536, %v532
    %v541 = vmax.f32 %v537, %v533
    %v542 = vmax.f32 %v538, %v534
    %543 = vst [vmem:[%s3] sm:$0xff] %v539
    %544 = vst [vmem:[%s3 + $0x8] sm:$0xff] %v540
    %545 = vst [vmem:[%s3 + $0x18] sm:$0xff] %v541
    %546 = vst [vmem:[%s3 + $0x20] sm:$0xff] %v542
    %v549 = vrot.slane %v520, 7
    %v550 = vrot.slane %v522, 7
    %v553 = vmax.f32 %v539, %v549
    %v554 = vmax.f32 %v541, %v550
    %555 = vst [vmem:[%s3 + $0x10] sm:$0x1] %v553
    %556 = vst [vmem:[%s3 + $0x28] sm:$0x1] %v554
    // Predicated region
    $region22: #{tpu_custom_call.1} parent=1 // pred_check
      _
    $region23: #{tpu_custom_call.1} parent=1 // pred_check_branch
      %558 = sbr.rel (0) target = $region25
    $region24: #{tpu_custom_call.1} parent=1 // pred_region
      _
    $region25: #{tpu_custom_call.1} parent=1 // pred_fallthru
      _
    // Predicated region
    $region26: #{tpu_custom_call.1} parent=1 // pred_check
      _
    $region27: #{tpu_custom_call.1} parent=1 // pred_check_branch
      %560 = sbr.rel (0) target = $region29
    $region28: #{tpu_custom_call.1} parent=1 // pred_region
      _
    $region29: #{tpu_custom_call.1} parent=1 // pred_fallthru
      _
    %561 = vsyncpa [#allocation3], 1
    %562 = vsyncpa [#allocation5], 1

</llo_original>
